<compile_context>
chip_gen: v6e
topology: v6e:2x2x1
jax: 0.10.0
libtpu: 0.0.40
codegen_flags: <defaults>
</compile_context>

<pallas_src>
import functools

import jax
import jax.numpy as jnp
import numpy as np
from jax.experimental import pallas as pl
from jax.experimental.pallas import tpu as pltpu


def _fused_modulator_kernel(x_ref, w1t_ref, w2_ref, o_ref):
    """Fused proj1 -> (folded permute) -> proj2.

    x_ref  : (B, K)        flattened NCHW input, K = C*H*W          (bf16)
    w1t_ref: (K, F*C)      proj1 weight, rows pre-permuted, pre-transposed (bf16)
    w2_ref : (F*C, F*D)    block-diagonal expansion of proj2 weight (bf16)
    o_ref  : (B, F*D)      lane-dense output slab                   (f32)
    """
    # proj1: canonical (M, K) @ (K, N) -- contraction on the sublane axis of
    # the RHS, MXU-native, no in-kernel weight relayout.  f32 accumulation.
    s = jnp.dot(x_ref[...], w1t_ref[...], preferred_element_type=jnp.float32)
    # proj2 with the permute folded into the block-diagonal weight: single
    # lane-dense (B, F*D) slab, fully unmasked 256-lane stores.
    o_ref[...] = jnp.dot(
        s.astype(w2_ref.dtype), w2_ref[...], preferred_element_type=jnp.float32
    ).astype(o_ref.dtype)


def prepare_weights(w1, w2, *, vae_channel, num_freqs, dim, dtype=jnp.bfloat16):
    """One-time (init-time) weight preprocessing; no per-forward cost.

    w1: (C*F, K) torch Linear layout (out, in) for proj1
    w2: (D, C)   torch Linear layout (out, in) for proj2
    Returns:
      w1t    : (K, F*C)   rows reordered c*F+f -> f*C+c (folds permute(0,2,1)),
                          then transposed to MXU-native (contract, out) layout
      w2_big : (F*C, F*D) block-diag: w2_big[f*C+c, f*D+d] = w2[d, c]
    Both cast once to `dtype` (default bf16).
    """
    C, F, D = vae_channel, num_freqs, dim
    K = w1.shape[1]
    w1_perm = w1.reshape(C, F, K).transpose(1, 0, 2).reshape(F * C, K)
    w1t = w1_perm.T  # (K, F*C): canonical RHS layout for jnp.dot
    eye_f = jnp.eye(F, dtype=w2.dtype)
    w2_big = jnp.einsum("fg,dc->fcgd", eye_f, w2).reshape(F * C, F * D)
    return w1t.astype(dtype), w2_big.astype(dtype)


@functools.partial(jax.jit, static_argnames=("num_freqs", "dim"))
def linear_modulator_forward(x, w1t, w2_big, *, num_freqs, dim):
    """x: (B, C, H, W) -> (B, num_freqs, dim) in float32."""
    B = x.shape[0]
    # Row-major NCHW flatten, same as torch reshape(B, -1); cast once to bf16.
    x_flat = x.reshape(B, -1).astype(w1t.dtype)
    K = x_flat.shape[1]
    FC = w1t.shape[1]
    FD = w2_big.shape[1]

    flops = 2 * B * K * FC + 2 * B * FC * FD
    bytes_accessed = (
        x_flat.size * x_flat.dtype.itemsize
        + w1t.size * w1t.dtype.itemsize
        + w2_big.size * w2_big.dtype.itemsize
        + B * FD * 4  # f32 output slab
    )

    out_slab = pl.pallas_call(
        _fused_modulator_kernel,
        out_shape=jax.ShapeDtypeStruct((B, num_freqs * dim), jnp.float32),
        in_specs=[
            pl.BlockSpec(memory_space=pltpu.MemorySpace.VMEM),
            pl.BlockSpec(memory_space=pltpu.MemorySpace.VMEM),
            pl.BlockSpec(memory_space=pltpu.MemorySpace.VMEM),
        ],
        out_specs=pl.BlockSpec(memory_space=pltpu.MemorySpace.VMEM),
        cost_estimate=pl.CostEstimate(
            flops=flops, transcendentals=0, bytes_accessed=bytes_accessed
        ),
    )(x_flat, w1t, w2_big)
    return out_slab.reshape(B, num_freqs, dim)


if __name__ == "__main__":
    # Small shapes consistent with the module.
    B, C, H, W = 2, 4, 16, 16        # vae_channel=4, latent_shape=16
    num_freqs, dim = 8, 32

    key = jax.random.PRNGKey(0)
    kx, k1, k2 = jax.random.split(key, 3)

    x = jax.random.normal(kx, (B, C, H, W), dtype=jnp.float32)

    # Deterministic parameter init in torch Linear weight layout (out, in).
    fan_in1 = C * H * W
    bound1 = 1.0 / np.sqrt(fan_in1)
    w1 = jax.random.uniform(
        k1, (C * num_freqs, C * H * W), jnp.float32, -bound1, bound1
    )
    bound2 = 1.0 / np.sqrt(C)
    w2 = jax.random.uniform(k2, (dim, C), jnp.float32, -bound2, bound2)

    # One-time weight preprocessing (static parameters, bf16).
    w1t, w2_big = prepare_weights(
        w1, w2, vae_channel=C, num_freqs=num_freqs, dim=dim
    )
    w1t = jax.block_until_ready(w1t)
    w2_big = jax.block_until_ready(w2_big)

    out = linear_modulator_forward(x, w1t, w2_big, num_freqs=num_freqs, dim=dim)
    out = jax.block_until_ready(out)
    assert out.shape == (B, num_freqs, dim)

    # Reference 1: matched-precision (bf16 operands, f32 accumulation) pure-JAX
    # replication of the PyTorch module -- checks the permute fold and the
    # block-diagonal w2 expansion are index-exact.
    xb = x.reshape(B, -1).astype(jnp.bfloat16)
    w1b = w1.astype(jnp.bfloat16)
    w2b = w2.astype(jnp.bfloat16)
    y1 = jnp.dot(xb, w1b.T, preferred_element_type=jnp.float32)
    y1p = y1.reshape(B, C, num_freqs).transpose(0, 2, 1)
    ref_bf16 = jnp.dot(
        y1p.astype(jnp.bfloat16), w2b.T, preferred_element_type=jnp.float32
    )
    np.testing.assert_allclose(
        np.asarray(out), np.asarray(ref_bf16), rtol=1e-2, atol=1e-2
    )

    # Reference 2: full-f32 PyTorch-exact reference; tolerance relaxed because
    # the kernel runs bf16 operands with f32 accumulation.
    ref_f32 = x.reshape(B, -1) @ w1.T
    ref_f32 = ref_f32.reshape(B, C, num_freqs).transpose(0, 2, 1) @ w2.T
    np.testing.assert_allclose(
        np.asarray(out), np.asarray(ref_f32), rtol=5e-2, atol=5e-2
    )

    print("KERNEL_OK")
</pallas_src>

<mosaic_0001>
module attributes {stable_mosaic.version = 11 : i64} {
  func.func @_fused_modulator_kernel(%arg0: memref<2x1024xbf16, #tpu.memory_space<vmem>>, %arg1: memref<1024x32xbf16, #tpu.memory_space<vmem>>, %arg2: memref<32x256xbf16, #tpu.memory_space<vmem>>, %arg3: memref<2x256xf32, #tpu.memory_space<vmem>>) attributes {dimension_semantics = [], scalar_prefetch = 0 : i64, scratch_operands = 0 : i64, tpu.core_type = #tpu.core_type<tc>} {
    %c0 = arith.constant 0 : index
    %c0_0 = arith.constant 0 : index
    %0 = vector.load %arg0[%c0, %c0_0] : memref<2x1024xbf16, #tpu.memory_space<vmem>>, vector<2x1024xbf16>
    %c0_1 = arith.constant 0 : index
    %c0_2 = arith.constant 0 : index
    %1 = vector.load %arg1[%c0_1, %c0_2] : memref<1024x32xbf16, #tpu.memory_space<vmem>>, vector<1024x32xbf16>
    %cst = arith.constant dense<0.000000e+00> : vector<2x32xf32>
    %2 = tpu.matmul %0, %1, %cst {dimension_numbers = #tpu.dot_dimension_numbers<[1], [0], [0], [1], [0, 0, 1, 1], [], []>} : vector<2x1024xbf16>, vector<1024x32xbf16>, vector<2x32xf32> -> vector<2x32xf32>
    %3 = arith.truncf %2 : vector<2x32xf32> to vector<2x32xbf16>
    %c0_3 = arith.constant 0 : index
    %c0_4 = arith.constant 0 : index
    %4 = vector.load %arg2[%c0_3, %c0_4] : memref<32x256xbf16, #tpu.memory_space<vmem>>, vector<32x256xbf16>
    %cst_5 = arith.constant dense<0.000000e+00> : vector<2x256xf32>
    %5 = tpu.matmul %3, %4, %cst_5 {dimension_numbers = #tpu.dot_dimension_numbers<[1], [0], [0], [1], [0, 0, 1, 1], [], []>} : vector<2x32xbf16>, vector<32x256xbf16>, vector<2x256xf32> -> vector<2x256xf32>
    %c0_6 = arith.constant 0 : index
    %c0_7 = arith.constant 0 : index
    %6 = vector.load %arg3[%c0_6, %c0_7] : memref<2x256xf32, #tpu.memory_space<vmem>>, vector<2x256xf32>
    tpu.vector_store %arg3[%c0_6, %c0_7], %5 {strides = array<i32>} : memref<2x256xf32, #tpu.memory_space<vmem>>, vector<2x256xf32>,
    return
  }
}

</mosaic_0001>

<llo_original>
// kernel: linear_modulator_forward.1
$region0: #{linear_modulator_forward.1}
  #allocation0 [shape = 'u32[]', space=smem, size = 0x4, offset = 0x4, fixed_abs, tag = 'smem constant byte address 0x4 - core index']
  #allocation1 [shape = 'u32[144,128]{1,0:T(1,128)}', space=vmem, size = 0x12000, scoped, tag = 'internal scratch']
  %s0 = inlined_call_operand.vmem [shape: bf16[2,1024], index: 0, kind: input, shape index: {}]
  %s1 = inlined_call_operand.vmem [shape: bf16[1024,32], index: 1, kind: input, shape index: {}]
  %s2 = inlined_call_operand.vmem [shape: bf16[32,256], index: 2, kind: input, shape index: {}]
  %s3 = inlined_call_operand.vmem [shape: f32[2,256], index: 3, kind: output, shape index: {}]
  %s4 = sld [smem:[#allocation0]]
  $region22: #{linear_modulator_forward.1} parent=0
    _
  %s6 = ssub.s32 1, %s4
  %s7 = scalar_select 0, %s6, %s4
  // Predicated region
  $region2: #{linear_modulator_forward.1} parent=0 // pred_check
    _
  $region3: #{linear_modulator_forward.1} parent=0 // pred_check_branch
    %9 = sbr.rel (0) target = $region5
  $region4: #{linear_modulator_forward.1} parent=0 // pred_region
    _
  $region5: #{linear_modulator_forward.1} parent=0 // pred_fallthru
    _
  // Predicated region
  $region6: #{linear_modulator_forward.1} parent=0 // pred_check
    _
  $region7: #{linear_modulator_forward.1} parent=0 // pred_check_branch
    %11 = sbr.rel (0) target = $region9
  $region8: #{linear_modulator_forward.1} parent=0 // pred_region
    _
  $region9: #{linear_modulator_forward.1} parent=0 // pred_fallthru
    _
  // Predicated region
  $region10: #{linear_modulator_forward.1} parent=0 // pred_check
    _
  $region11: #{linear_modulator_forward.1} parent=0 // pred_check_branch
    %13 = sbr.rel (0) target = $region13
  $region12: #{linear_modulator_forward.1} parent=0 // pred_region
    _
  $region13: #{linear_modulator_forward.1} parent=0 // pred_fallthru
    _
  %v15 = vld [vmem:[%s0] sm:$0xff]
  %v16 = vld [vmem:[%s1] sm:$0xf]
  %v17 = vld [vmem:[%s1 + $0x4] sm:$0xf]
  %v18 = vld [vmem:[%s1 + $0x8] sm:$0xf]
  %v19 = vld [vmem:[%s1 + $0xc] sm:$0xf]
  %v20 = vld [vmem:[%s1 + $0x10] sm:$0xf]
  %v21 = vld [vmem:[%s1 + $0x14] sm:$0xf]
  %v22 = vld [vmem:[%s1 + $0x18] sm:$0xf]
  %v23 = vld [vmem:[%s1 + $0x1c] sm:$0xf]
  %v24 = vld [vmem:[%s1 + $0x20] sm:$0xf]
  %v25 = vld [vmem:[%s1 + $0x24] sm:$0xf]
  %v26 = vld [vmem:[%s1 + $0x28] sm:$0xf]
  %v27 = vld [vmem:[%s1 + $0x2c] sm:$0xf]
  %v28 = vld [vmem:[%s1 + $0x30] sm:$0xf]
  %v29 = vld [vmem:[%s1 + $0x34] sm:$0xf]
  %v30 = vld [vmem:[%s1 + $0x38] sm:$0xf]
  %v31 = vld [vmem:[%s1 + $0x3c] sm:$0xf]
  %v32 = vld [vmem:[%s1 + $0x40] sm:$0xf]
  %v33 = vld [vmem:[%s1 + $0x44] sm:$0xf]
  %v34 = vld [vmem:[%s1 + $0x48] sm:$0xf]
  %v35 = vld [vmem:[%s1 + $0x4c] sm:$0xf]
  %v36 = vld [vmem:[%s1 + $0x50] sm:$0xf]
  %v37 = vld [vmem:[%s1 + $0x54] sm:$0xf]
  %v38 = vld [vmem:[%s1 + $0x58] sm:$0xf]
  %v39 = vld [vmem:[%s1 + $0x5c] sm:$0xf]
  %v40 = vld [vmem:[%s1 + $0x60] sm:$0xf]
  %v41 = vld [vmem:[%s1 + $0x64] sm:$0xf]
  %v42 = vld [vmem:[%s1 + $0x68] sm:$0xf]
  %v43 = vld [vmem:[%s1 + $0x6c] sm:$0xf]
  %v44 = vld [vmem:[%s1 + $0x70] sm:$0xf]
  %v45 = vld [vmem:[%s1 + $0x74] sm:$0xf]
  %v46 = vld [vmem:[%s1 + $0x78] sm:$0xf]
  %v47 = vld [vmem:[%s1 + $0x7c] sm:$0xf]
  %v48 = vld [vmem:[%s1 + $0x80] sm:$0xf]
  %v49 = vld [vmem:[%s1 + $0x84] sm:$0xf]
  %v50 = vld [vmem:[%s1 + $0x88] sm:$0xf]
  %v51 = vld [vmem:[%s1 + $0x8c] sm:$0xf]
  %v52 = vld [vmem:[%s1 + $0x90] sm:$0xf]
  %v53 = vld [vmem:[%s1 + $0x94] sm:$0xf]
  %v54 = vld [vmem:[%s1 + $0x98] sm:$0xf]
  %v55 = vld [vmem:[%s1 + $0x9c] sm:$0xf]
  %v56 = vld [vmem:[%s1 + $0xa0] sm:$0xf]
  %v57 = vld [vmem:[%s1 + $0xa4] sm:$0xf]
  %v58 = vld [vmem:[%s1 + $0xa8] sm:$0xf]
  %v59 = vld [vmem:[%s1 + $0xac] sm:$0xf]
  %v60 = vld [vmem:[%s1 + $0xb0] sm:$0xf]
  %v61 = vld [vmem:[%s1 + $0xb4] sm:$0xf]
  %v62 = vld [vmem:[%s1 + $0xb8] sm:$0xf]
  %v63 = vld [vmem:[%s1 + $0xbc] sm:$0xf]
  %v64 = vld [vmem:[%s1 + $0xc0] sm:$0xf]
  %v65 = vld [vmem:[%s1 + $0xc4] sm:$0xf]
  %v66 = vld [vmem:[%s1 + $0xc8] sm:$0xf]
  %v67 = vld [vmem:[%s1 + $0xcc] sm:$0xf]
  %v68 = vld [vmem:[%s1 + $0xd0] sm:$0xf]
  %v69 = vld [vmem:[%s1 + $0xd4] sm:$0xf]
  %v70 = vld [vmem:[%s1 + $0xd8] sm:$0xf]
  %v71 = vld [vmem:[%s1 + $0xdc] sm:$0xf]
  %v72 = vld [vmem:[%s1 + $0xe0] sm:$0xf]
  %v73 = vld [vmem:[%s1 + $0xe4] sm:$0xf]
  %v74 = vld [vmem:[%s1 + $0xe8] sm:$0xf]
  %v75 = vld [vmem:[%s1 + $0xec] sm:$0xf]
  %v76 = vld [vmem:[%s1 + $0xf0] sm:$0xf]
  %v77 = vld [vmem:[%s1 + $0xf4] sm:$0xf]
  %v78 = vld [vmem:[%s1 + $0xf8] sm:$0xf]
  %v79 = vld [vmem:[%s1 + $0xfc] sm:$0xf]
  %v80 = vld [vmem:[%s1 + $0x100] sm:$0xf]
  %v81 = vld [vmem:[%s1 + $0x104] sm:$0xf]
  %v82 = vld [vmem:[%s1 + $0x108] sm:$0xf]
  %v83 = vld [vmem:[%s1 + $0x10c] sm:$0xf]
  %v84 = vld [vmem:[%s1 + $0x110] sm:$0xf]
  %v85 = vld [vmem:[%s1 + $0x114] sm:$0xf]
  %v86 = vld [vmem:[%s1 + $0x118] sm:$0xf]
  %v87 = vld [vmem:[%s1 + $0x11c] sm:$0xf]
  %v88 = vld [vmem:[%s1 + $0x120] sm:$0xf]
  %v89 = vld [vmem:[%s1 + $0x124] sm:$0xf]
  %v90 = vld [vmem:[%s1 + $0x128] sm:$0xf]
  %v91 = vld [vmem:[%s1 + $0x12c] sm:$0xf]
  %v92 = vld [vmem:[%s1 + $0x130] sm:$0xf]
  %v93 = vld [vmem:[%s1 + $0x134] sm:$0xf]
  %v94 = vld [vmem:[%s1 + $0x138] sm:$0xf]
  %v95 = vld [vmem:[%s1 + $0x13c] sm:$0xf]
  %v96 = vld [vmem:[%s1 + $0x140] sm:$0xf]
  %v97 = vld [vmem:[%s1 + $0x144] sm:$0xf]
  %v98 = vld [vmem:[%s1 + $0x148] sm:$0xf]
  %v99 = vld [vmem:[%s1 + $0x14c] sm:$0xf]
  %v100 = vld [vmem:[%s1 + $0x150] sm:$0xf]
  %v101 = vld [vmem:[%s1 + $0x154] sm:$0xf]
  %v102 = vld [vmem:[%s1 + $0x158] sm:$0xf]
  %v103 = vld [vmem:[%s1 + $0x15c] sm:$0xf]
  %v104 = vld [vmem:[%s1 + $0x160] sm:$0xf]
  %v105 = vld [vmem:[%s1 + $0x164] sm:$0xf]
  %v106 = vld [vmem:[%s1 + $0x168] sm:$0xf]
  %v107 = vld [vmem:[%s1 + $0x16c] sm:$0xf]
  %v108 = vld [vmem:[%s1 + $0x170] sm:$0xf]
  %v109 = vld [vmem:[%s1 + $0x174] sm:$0xf]
  %v110 = vld [vmem:[%s1 + $0x178] sm:$0xf]
  %v111 = vld [vmem:[%s1 + $0x17c] sm:$0xf]
  %v112 = vld [vmem:[%s1 + $0x180] sm:$0xf]
  %v113 = vld [vmem:[%s1 + $0x184] sm:$0xf]
  %v114 = vld [vmem:[%s1 + $0x188] sm:$0xf]
  %v115 = vld [vmem:[%s1 + $0x18c] sm:$0xf]
  %v116 = vld [vmem:[%s1 + $0x190] sm:$0xf]
  %v117 = vld [vmem:[%s1 + $0x194] sm:$0xf]
  %v118 = vld [vmem:[%s1 + $0x198] sm:$0xf]
  %v119 = vld [vmem:[%s1 + $0x19c] sm:$0xf]
  %v120 = vld [vmem:[%s1 + $0x1a0] sm:$0xf]
  %v121 = vld [vmem:[%s1 + $0x1a4] sm:$0xf]
  %v122 = vld [vmem:[%s1 + $0x1a8] sm:$0xf]
  %v123 = vld [vmem:[%s1 + $0x1ac] sm:$0xf]
  %v124 = vld [vmem:[%s1 + $0x1b0] sm:$0xf]
  %v125 = vld [vmem:[%s1 + $0x1b4] sm:$0xf]
  %v126 = vld [vmem:[%s1 + $0x1b8] sm:$0xf]
  %v127 = vld [vmem:[%s1 + $0x1bc] sm:$0xf]
  %v128 = vld [vmem:[%s1 + $0x1c0] sm:$0xf]
  %v129 = vld [vmem:[%s1 + $0x1c4] sm:$0xf]
  %v130 = vld [vmem:[%s1 + $0x1c8] sm:$0xf]
  %v131 = vld [vmem:[%s1 + $0x1cc] sm:$0xf]
  %v132 = vld [vmem:[%s1 + $0x1d0] sm:$0xf]
  %v133 = vld [vmem:[%s1 + $0x1d4] sm:$0xf]
  %v134 = vld [vmem:[%s1 + $0x1d8] sm:$0xf]
  %v135 = vld [vmem:[%s1 + $0x1dc] sm:$0xf]
  %v136 = vld [vmem:[%s1 + $0x1e0] sm:$0xf]
  %v137 = vld [vmem:[%s1 + $0x1e4] sm:$0xf]
  %v138 = vld [vmem:[%s1 + $0x1e8] sm:$0xf]
  %v139 = vld [vmem:[%s1 + $0x1ec] sm:$0xf]
  %v140 = vld [vmem:[%s1 + $0x1f0] sm:$0xf]
  %v141 = vld [vmem:[%s1 + $0x1f4] sm:$0xf]
  %v142 = vld [vmem:[%s1 + $0x1f8] sm:$0xf]
  %v143 = vld [vmem:[%s1 + $0x1fc] sm:$0xf]
  %v145 = vcombine.high %v15, %v15
  %v147 = vunpack.c.l.s4 1966171168
  %v148 = vunpack.c.0.s8 %v147
  %v149 = vlaneseq
  %v150 = vshrl.u32 %v149, 7
  %v151 = vsub.s32 %v148, %v150
  %v152 = vrot.slane %v15, %v151
  %v154 = vunpack.c.l.s4 1966171168
  %v155 = vunpack.c.0.s8 %v154
  %v156 = vlaneseq
  %v157 = vshrl.u32 %v156, 7
  %v158 = vsub.s32 %v155, %v157
  %v159 = vrot.slane %v145, %v158
  %v160 = vcombine.high %v152, %v152
  %v161 = vcombine.high %v159, %v159
  %v163 = vunpack.c.l.s4 1966171168
  %v164 = vunpack.c.0.s8 %v163
  %v165 = vlaneseq
  %v166 = vshrl.u32 %v165, 7
  %v167 = vsub.s32 %v164, %v166
  %v168 = vrot.slane %v152, %v167
  %v170 = vunpack.c.l.s4 1966171168
  %v171 = vunpack.c.0.s8 %v170
  %v172 = vlaneseq
  %v173 = vshrl.u32 %v172, 7
  %v174 = vsub.s32 %v171, %v173
  %v175 = vrot.slane %v159, %v174
  %v177 = vunpack.c.l.s4 1966171168
  %v178 = vunpack.c.0.s8 %v177
  %v179 = vlaneseq
  %v180 = vshrl.u32 %v179, 7
  %v181 = vsub.s32 %v178, %v180
  %v182 = vrot.slane %v160, %v181
  %v184 = vunpack.c.l.s4 1966171168
  %v185 = vunpack.c.0.s8 %v184
  %v186 = vlaneseq
  %v187 = vshrl.u32 %v186, 7
  %v188 = vsub.s32 %v185, %v187
  %v189 = vrot.slane %v161, %v188
  %v190 = vcombine.high %v168, %v168
  %v191 = vcombine.high %v175, %v175
  %v192 = vcombine.high %v182, %v182
  %v193 = vcombine.high %v189, %v189
  %v330 = vunpack.c.l.b16 %v16
  %v331 = vunpack.c.l.b16 %v17
  %v332 = vunpack.c.l.b16 %v18
  %v333 = vunpack.c.l.b16 %v19
  %v334 = vunpack.c.l.b16 %v20
  %v335 = vunpack.c.l.b16 %v21
  %v336 = vunpack.c.l.b16 %v22
  %v337 = vunpack.c.l.b16 %v23
  %v338 = vunpack.c.l.b16 %v24
  %v339 = vunpack.c.l.b16 %v25
  %v340 = vunpack.c.l.b16 %v26
  %v341 = vunpack.c.l.b16 %v27
  %v342 = vunpack.c.l.b16 %v28
  %v343 = vunpack.c.l.b16 %v29
  %v344 = vunpack.c.l.b16 %v30
  %v345 = vunpack.c.l.b16 %v31
  %v346 = vunpack.c.l.b16 %v32
  %v347 = vunpack.c.l.b16 %v33
  %v348 = vunpack.c.l.b16 %v34
  %v349 = vunpack.c.l.b16 %v35
  %v350 = vunpack.c.l.b16 %v36
  %v351 = vunpack.c.l.b16 %v37
  %v352 = vunpack.c.l.b16 %v38
  %v353 = vunpack.c.l.b16 %v39
  %v354 = vunpack.c.l.b16 %v40
  %v355 = vunpack.c.l.b16 %v41
  %v356 = vunpack.c.l.b16 %v42
  %v357 = vunpack.c.l.b16 %v43
  %v358 = vunpack.c.l.b16 %v44
  %v359 = vunpack.c.l.b16 %v45
  %v360 = vunpack.c.l.b16 %v46
  %v361 = vunpack.c.l.b16 %v47
  %v362 = vunpack.c.l.b16 %v48
  %v363 = vunpack.c.l.b16 %v49
  %v364 = vunpack.c.l.b16 %v50
  %v365 = vunpack.c.l.b16 %v51
  %v366 = vunpack.c.l.b16 %v52
  %v367 = vunpack.c.l.b16 %v53
  %v368 = vunpack.c.l.b16 %v54
  %v369 = vunpack.c.l.b16 %v55
  %v370 = vunpack.c.l.b16 %v56
  %v371 = vunpack.c.l.b16 %v57
  %v372 = vunpack.c.l.b16 %v58
  %v373 = vunpack.c.l.b16 %v59
  %v374 = vunpack.c.l.b16 %v60
  %v375 = vunpack.c.l.b16 %v61
  %v376 = vunpack.c.l.b16 %v62
  %v377 = vunpack.c.l.b16 %v63
  %v378 = vunpack.c.l.b16 %v64
  %v379 = vunpack.c.l.b16 %v65
  %v380 = vunpack.c.l.b16 %v66
  %v381 = vunpack.c.l.b16 %v67
  %v382 = vunpack.c.l.b16 %v68
  %v383 = vunpack.c.l.b16 %v69
  %v384 = vunpack.c.l.b16 %v70
  %v385 = vunpack.c.l.b16 %v71
  %v386 = vunpack.c.l.b16 %v72
  %v387 = vunpack.c.l.b16 %v73
  %v388 = vunpack.c.l.b16 %v74
  %v389 = vunpack.c.l.b16 %v75
  %v390 = vunpack.c.l.b16 %v76
  %v391 = vunpack.c.l.b16 %v77
  %v392 = vunpack.c.l.b16 %v78
  %v393 = vunpack.c.l.b16 %v79
  %v394 = vunpack.c.l.b16 %v80
  %v395 = vunpack.c.l.b16 %v81
  %v396 = vunpack.c.l.b16 %v82
  %v397 = vunpack.c.l.b16 %v83
  %v398 = vunpack.c.l.b16 %v84
  %v399 = vunpack.c.l.b16 %v85
  %v400 = vunpack.c.l.b16 %v86
  %v401 = vunpack.c.l.b16 %v87
  %v402 = vunpack.c.l.b16 %v88
  %v403 = vunpack.c.l.b16 %v89
  %v404 = vunpack.c.l.b16 %v90
  %v405 = vunpack.c.l.b16 %v91
  %v406 = vunpack.c.l.b16 %v92
  %v407 = vunpack.c.l.b16 %v93
  %v408 = vunpack.c.l.b16 %v94
  %v409 = vunpack.c.l.b16 %v95
  %v410 = vunpack.c.l.b16 %v96
  %v411 = vunpack.c.l.b16 %v97
  %v412 = vunpack.c.l.b16 %v98
  %v413 = vunpack.c.l.b16 %v99
  %v414 = vunpack.c.l.b16 %v100
  %v415 = vunpack.c.l.b16 %v101
  %v416 = vunpack.c.l.b16 %v102
  %v417 = vunpack.c.l.b16 %v103
  %v418 = vunpack.c.l.b16 %v104
  %v419 = vunpack.c.l.b16 %v105
  %v420 = vunpack.c.l.b16 %v106
  %v421 = vunpack.c.l.b16 %v107
  %v422 = vunpack.c.l.b16 %v108
  %v423 = vunpack.c.l.b16 %v109
  %v424 = vunpack.c.l.b16 %v110
  %v425 = vunpack.c.l.b16 %v111
  %v426 = vunpack.c.l.b16 %v112
  %v427 = vunpack.c.l.b16 %v113
  %v428 = vunpack.c.l.b16 %v114
  %v429 = vunpack.c.l.b16 %v115
  %v430 = vunpack.c.l.b16 %v116
  %v431 = vunpack.c.l.b16 %v117
  %v432 = vunpack.c.l.b16 %v118
  %v433 = vunpack.c.l.b16 %v119
  %v434 = vunpack.c.l.b16 %v120
  %v435 = vunpack.c.l.b16 %v121
  %v436 = vunpack.c.l.b16 %v122
  %v437 = vunpack.c.l.b16 %v123
  %v438 = vunpack.c.l.b16 %v124
  %v439 = vunpack.c.l.b16 %v125
  %v440 = vunpack.c.l.b16 %v126
  %v441 = vunpack.c.l.b16 %v127
  %v442 = vunpack.c.l.b16 %v128
  %v443 = vunpack.c.l.b16 %v129
  %v444 = vunpack.c.l.b16 %v130
  %v445 = vunpack.c.l.b16 %v131
  %v446 = vunpack.c.l.b16 %v132
  %v447 = vunpack.c.l.b16 %v133
  %v448 = vunpack.c.l.b16 %v134
  %v449 = vunpack.c.l.b16 %v135
  %v450 = vunpack.c.l.b16 %v136
  %v451 = vunpack.c.l.b16 %v137
  %v452 = vunpack.c.l.b16 %v138
  %v453 = vunpack.c.l.b16 %v139
  %v454 = vunpack.c.l.b16 %v140
  %v455 = vunpack.c.l.b16 %v141
  %v456 = vunpack.c.l.b16 %v142
  %v457 = vunpack.c.l.b16 %v143
  %v458 = vpack.c.b16 %v331, %v330
  %v459 = vpack.c.b16 %v333, %v332
  %v460 = vpack.c.b16 %v335, %v334
  %v461 = vpack.c.b16 %v337, %v336
  %v462 = vpack.c.b16 %v339, %v338
  %v463 = vpack.c.b16 %v341, %v340
  %v464 = vpack.c.b16 %v343, %v342
  %v465 = vpack.c.b16 %v345, %v344
  %v466 = vpack.c.b16 %v347, %v346
  %v467 = vpack.c.b16 %v349, %v348
  %v468 = vpack.c.b16 %v351, %v350
  %v469 = vpack.c.b16 %v353, %v352
  %v470 = vpack.c.b16 %v355, %v354
  %v471 = vpack.c.b16 %v357, %v356
  %v472 = vpack.c.b16 %v359, %v358
  %v473 = vpack.c.b16 %v361, %v360
  %v474 = vpack.c.b16 %v363, %v362
  %v475 = vpack.c.b16 %v365, %v364
  %v476 = vpack.c.b16 %v367, %v366
  %v477 = vpack.c.b16 %v369, %v368
  %v478 = vpack.c.b16 %v371, %v370
  %v479 = vpack.c.b16 %v373, %v372
  %v480 = vpack.c.b16 %v375, %v374
  %v481 = vpack.c.b16 %v377, %v376
  %v482 = vpack.c.b16 %v379, %v378
  %v483 = vpack.c.b16 %v381, %v380
  %v484 = vpack.c.b16 %v383, %v382
  %v485 = vpack.c.b16 %v385, %v384
  %v486 = vpack.c.b16 %v387, %v386
  %v487 = vpack.c.b16 %v389, %v388
  %v488 = vpack.c.b16 %v391, %v390
  %v489 = vpack.c.b16 %v393, %v392
  %v490 = vpack.c.b16 %v395, %v394
  %v491 = vpack.c.b16 %v397, %v396
  %v492 = vpack.c.b16 %v399, %v398
  %v493 = vpack.c.b16 %v401, %v400
  %v494 = vpack.c.b16 %v403, %v402
  %v495 = vpack.c.b16 %v405, %v404
  %v496 = vpack.c.b16 %v407, %v406
  %v497 = vpack.c.b16 %v409, %v408
  %v498 = vpack.c.b16 %v411, %v410
  %v499 = vpack.c.b16 %v413, %v412
  %v500 = vpack.c.b16 %v415, %v414
  %v501 = vpack.c.b16 %v417, %v416
  %v502 = vpack.c.b16 %v419, %v418
  %v503 = vpack.c.b16 %v421, %v420
  %v504 = vpack.c.b16 %v423, %v422
  %v505 = vpack.c.b16 %v425, %v424
  %v506 = vpack.c.b16 %v427, %v426
  %v507 = vpack.c.b16 %v429, %v428
  %v508 = vpack.c.b16 %v431, %v430
  %v509 = vpack.c.b16 %v433, %v432
  %v510 = vpack.c.b16 %v435, %v434
  %v511 = vpack.c.b16 %v437, %v436
  %v512 = vpack.c.b16 %v439, %v438
  %v513 = vpack.c.b16 %v441, %v440
  %v514 = vpack.c.b16 %v443, %v442
  %v515 = vpack.c.b16 %v445, %v444
  %v516 = vpack.c.b16 %v447, %v446
  %v517 = vpack.c.b16 %v449, %v448
  %v518 = vpack.c.b16 %v451, %v450
  %v519 = vpack.c.b16 %v453, %v452
  %v520 = vpack.c.b16 %v455, %v454
  %v521 = vpack.c.b16 %v457, %v456
  %586 = vmatprep.subr.bf16.mxu0 0
  %587 = vmatpush1.bf16.msra.mxu0 %v465
  %588 = vmatprep.subr.bf16.mxu0 0
  %589 = vmatpush1.bf16.msra.mxu0 %v464
  %590 = vmatprep.subr.bf16.mxu0 0
  %591 = vmatpush1.bf16.msra.mxu0 %v463
  %592 = vmatprep.subr.bf16.mxu0 0
  %593 = vmatpush1.bf16.msra.mxu0 %v462
  %594 = vmatprep.subr.bf16.mxu0 0
  %595 = vmatpush1.bf16.msra.mxu0 %v461
  %596 = vmatprep.subr.bf16.mxu0 0
  %597 = vmatpush1.bf16.msra.mxu0 %v460
  %598 = vmatprep.subr.bf16.mxu0 0
  %599 = vmatpush1.bf16.msra.mxu0 %v459
  %600 = vmatprep.subr.bf16.mxu0 0
  %601 = vmatpush1.bf16.msra.mxu0 %v458
  %602 = vmatprep.subr.bf16.mxu0 0
  %603 = vmatpush2.bf16.msra.mxu0 %v473
  %604 = vmatprep.subr.bf16.mxu0 0
  %605 = vmatpush2.bf16.msra.mxu0 %v472
  %606 = vmatprep.subr.bf16.mxu0 0
  %607 = vmatpush2.bf16.msra.mxu0 %v471
  %608 = vmatprep.subr.bf16.mxu0 0
  %609 = vmatpush2.bf16.msra.mxu0 %v470
  %610 = vmatprep.subr.bf16.mxu0 0
  %611 = vmatpush2.bf16.msra.mxu0 %v469
  %612 = vmatprep.subr.bf16.mxu0 0
  %613 = vmatpush2.bf16.msra.mxu0 %v468
  %614 = vmatprep.subr.bf16.mxu0 0
  %615 = vmatpush2.bf16.msra.mxu0 %v467
  %616 = vmatprep.subr.bf16.mxu0 0
  %617 = vmatpush2.bf16.msra.mxu0 %v466
  %618 = vmatprep.mubr.bf16.mxu0 %v182
  %619 = vmatmul.mubr.bf16.gmra.mxu0 %v168
  %v620 = vpop.f32.mrf.mxu0
  %v621 = vadd.f32 0.0, %v620
  %v622 = vpop.f32.mrf.mxu0
  %v623 = vpop.f32.mrf.mxu0
  %v624 = vpop.f32.mrf.mxu0
  %625 = vdwg.mxu0
  %626 = vmatprep.subr.bf16.mxu0 0
  %627 = vmatpush1.bf16.msra.mxu0 %v481
  %628 = vmatprep.subr.bf16.mxu0 0
  %629 = vmatpush1.bf16.msra.mxu0 %v480
  %630 = vmatprep.subr.bf16.mxu0 0
  %631 = vmatpush1.bf16.msra.mxu0 %v479
  %632 = vmatprep.subr.bf16.mxu0 0
  %633 = vmatpush1.bf16.msra.mxu0 %v478
  %634 = vmatprep.subr.bf16.mxu0 0
  %635 = vmatpush1.bf16.msra.mxu0 %v477
  %636 = vmatprep.subr.bf16.mxu0 0
  %637 = vmatpush1.bf16.msra.mxu0 %v476
  %638 = vmatprep.subr.bf16.mxu0 0
  %639 = vmatpush1.bf16.msra.mxu0 %v475
  %640 = vmatprep.subr.bf16.mxu0 0
  %641 = vmatpush1.bf16.msra.mxu0 %v474
  %642 = vmatprep.subr.bf16.mxu0 0
  %643 = vmatpush2.bf16.msra.mxu0 %v489
  %644 = vmatprep.subr.bf16.mxu0 0
  %645 = vmatpush2.bf16.msra.mxu0 %v488
  %646 = vmatprep.subr.bf16.mxu0 0
  %647 = vmatpush2.bf16.msra.mxu0 %v487
  %648 = vmatprep.subr.bf16.mxu0 0
  %649 = vmatpush2.bf16.msra.mxu0 %v486
  %650 = vmatprep.subr.bf16.mxu0 0
  %651 = vmatpush2.bf16.msra.mxu0 %v485
  %652 = vmatprep.subr.bf16.mxu0 0
  %653 = vmatpush2.bf16.msra.mxu0 %v484
  %654 = vmatprep.subr.bf16.mxu0 0
  %655 = vmatpush2.bf16.msra.mxu0 %v483
  %656 = vmatprep.subr.bf16.mxu0 0
  %657 = vmatpush2.bf16.msra.mxu0 %v482
  %658 = vmatprep.mubr.bf16.mxu0 %v192
  %659 = vmatmul.mubr.bf16.gmra.mxu0 %v190
  %v660 = vpop.f32.mrf.mxu0
  %v661 = vadd.f32 %v621, %v660
  %v662 = vpop.f32.mrf.mxu0
  %v663 = vpop.f32.mrf.mxu0
  %v664 = vpop.f32.mrf.mxu0
  %665 = vdwg.mxu0
  %666 = vmatprep.subr.bf16.mxu0 0
  %667 = vmatpush1.bf16.msra.mxu0 %v497
  %668 = vmatprep.subr.bf16.mxu0 0
  %669 = vmatpush1.bf16.msra.mxu0 %v496
  %670 = vmatprep.subr.bf16.mxu0 0
  %671 = vmatpush1.bf16.msra.mxu0 %v495
  %672 = vmatprep.subr.bf16.mxu0 0
  %673 = vmatpush1.bf16.msra.mxu0 %v494
  %674 = vmatprep.subr.bf16.mxu0 0
  %675 = vmatpush1.bf16.msra.mxu0 %v493
  %676 = vmatprep.subr.bf16.mxu0 0
  %677 = vmatpush1.bf16.msra.mxu0 %v492
  %678 = vmatprep.subr.bf16.mxu0 0
  %679 = vmatpush1.bf16.msra.mxu0 %v491
  %680 = vmatprep.subr.bf16.mxu0 0
  %681 = vmatpush1.bf16.msra.mxu0 %v490
  %682 = vmatprep.subr.bf16.mxu0 0
  %683 = vmatpush2.bf16.msra.mxu0 %v505
  %684 = vmatprep.subr.bf16.mxu0 0
  %685 = vmatpush2.bf16.msra.mxu0 %v504
  %686 = vmatprep.subr.bf16.mxu0 0
  %687 = vmatpush2.bf16.msra.mxu0 %v503
  %688 = vmatprep.subr.bf16.mxu0 0
  %689 = vmatpush2.bf16.msra.mxu0 %v502
  %690 = vmatprep.subr.bf16.mxu0 0
  %691 = vmatpush2.bf16.msra.mxu0 %v501
  %692 = vmatprep.subr.bf16.mxu0 0
  %693 = vmatpush2.bf16.msra.mxu0 %v500
  %694 = vmatprep.subr.bf16.mxu0 0
  %695 = vmatpush2.bf16.msra.mxu0 %v499
  %696 = vmatprep.subr.bf16.mxu0 0
  %697 = vmatpush2.bf16.msra.mxu0 %v498
  %698 = vmatprep.mubr.bf16.mxu0 %v189
  %699 = vmatmul.mubr.bf16.gmra.mxu0 %v175
  %v700 = vpop.f32.mrf.mxu0
  %v701 = vadd.f32 %v661, %v700
  %v702 = vpop.f32.mrf.mxu0
  %v703 = vpop.f32.mrf.mxu0
  %v704 = vpop.f32.mrf.mxu0
  %705 = vdwg.mxu0
  %706 = vmatprep.subr.bf16.mxu0 0
  %707 = vmatpush1.bf16.msra.mxu0 %v513
  %708 = vmatprep.subr.bf16.mxu0 0
  %709 = vmatpush1.bf16.msra.mxu0 %v512
  %710 = vmatprep.subr.bf16.mxu0 0
  %711 = vmatpush1.bf16.msra.mxu0 %v511
  %712 = vmatprep.subr.bf16.mxu0 0
  %713 = vmatpush1.bf16.msra.mxu0 %v510
  %714 = vmatprep.subr.bf16.mxu0 0
  %715 = vmatpush1.bf16.msra.mxu0 %v509
  %716 = vmatprep.subr.bf16.mxu0 0
  %717 = vmatpush1.bf16.msra.mxu0 %v508
  %718 = vmatprep.subr.bf16.mxu0 0
  %719 = vmatpush1.bf16.msra.mxu0 %v507
  %720 = vmatprep.subr.bf16.mxu0 0
  %721 = vmatpush1.bf16.msra.mxu0 %v506
  %722 = vmatprep.subr.bf16.mxu0 0
  %723 = vmatpush2.bf16.msra.mxu0 %v521
  %724 = vmatprep.subr.bf16.mxu0 0
  %725 = vmatpush2.bf16.msra.mxu0 %v520
  %726 = vmatprep.subr.bf16.mxu0 0
  %727 = vmatpush2.bf16.msra.mxu0 %v519
  %728 = vmatprep.subr.bf16.mxu0 0
  %729 = vmatpush2.bf16.msra.mxu0 %v518
  %730 = vmatprep.subr.bf16.mxu0 0
  %731 = vmatpush2.bf16.msra.mxu0 %v517
  %732 = vmatprep.subr.bf16.mxu0 0
  %733 = vmatpush2.bf16.msra.mxu0 %v516
  %734 = vmatprep.subr.bf16.mxu0 0
  %735 = vmatpush2.bf16.msra.mxu0 %v515
  %736 = vmatprep.subr.bf16.mxu0 0
  %737 = vmatpush2.bf16.msra.mxu0 %v514
  %738 = vmatprep.mubr.bf16.mxu0 %v193
  %739 = vmatmul.mubr.bf16.gmra.mxu0 %v191
  %v740 = vpop.f32.mrf.mxu0
  %v741 = vadd.f32 %v701, %v740
  %v742 = vpop.f32.mrf.mxu0
  %v743 = vpop.f32.mrf.mxu0
  %v744 = vpop.f32.mrf.mxu0
  %745 = vdwg.mxu0
  %v746 = vpack.c.bf16 %v741, %v741
  %v747 = vld [vmem:[%s2] sm:$0xff]
  %v748 = vld [vmem:[%s2 + $0x8] sm:$0xff]
  %v749 = vld [vmem:[%s2 + $0x10] sm:$0xff]
  %v750 = vld [vmem:[%s2 + $0x18] sm:$0xff]
  %v755 = vunpack.c.l.b16 %v747
  %v756 = vunpack.c.h.b16 %v747
  %v757 = vunpack.c.l.b16 %v748
  %v758 = vunpack.c.h.b16 %v748
  %v759 = vunpack.c.l.b16 %v749
  %v760 = vunpack.c.h.b16 %v749
  %v761 = vunpack.c.l.b16 %v750
  %v762 = vunpack.c.h.b16 %v750
  %v763 = vpack.c.b16 %v757, %v755
  %v764 = vpack.c.b16 %v758, %v756
  %v765 = vpack.c.b16 %v761, %v759
  %v766 = vpack.c.b16 %v762, %v760
  %vm771 = vcmask 261120
  %v773 = vsel %vm771, %v746, 0
  %775 = vmatprep.subr.bf16.mxu0 0
  %776 = vmatpush1.bf16.msra.mxu0 0
  %777 = vmatprep.subr.bf16.mxu0 0
  %778 = vmatpush1.bf16.msra.mxu0 0
  %779 = vmatprep.subr.bf16.mxu0 0
  %780 = vmatpush1.bf16.msra.mxu0 0
  %781 = vmatprep.subr.bf16.mxu0 0
  %782 = vmatpush1.bf16.msra.mxu0 0
  %783 = vmatprep.subr.bf16.mxu0 0
  %784 = vmatpush1.bf16.msra.mxu0 0
  %785 = vmatprep.subr.bf16.mxu0 0
  %786 = vmatpush1.bf16.msra.mxu0 0
  %787 = vmatprep.subr.bf16.mxu0 %v766
  %788 = vmatpush1.bf16.msra.mxu0 %v765
  %789 = vmatprep.subr.bf16.mxu0 %v764
  %790 = vmatpush1.bf16.msra.mxu0 %v763
  %791 = vmatprep.subr.bf16.mxu0 0
  %792 = vmatpush2.bf16.msra.mxu0 0
  %793 = vmatprep.subr.bf16.mxu0 0
  %794 = vmatpush2.bf16.msra.mxu0 0
  %795 = vmatprep.subr.bf16.mxu0 0
  %796 = vmatpush2.bf16.msra.mxu0 0
  %797 = vmatprep.subr.bf16.mxu0 0
  %798 = vmatpush2.bf16.msra.mxu0 0
  %799 = vmatprep.subr.bf16.mxu0 0
  %800 = vmatpush2.bf16.msra.mxu0 0
  %801 = vmatprep.subr.bf16.mxu0 0
  %802 = vmatpush2.bf16.msra.mxu0 0
  %803 = vmatprep.subr.bf16.mxu0 0
  %804 = vmatpush2.bf16.msra.mxu0 0
  %805 = vmatprep.subr.bf16.mxu0 0
  %806 = vmatpush2.bf16.msra.mxu0 0
  %807 = vmatprep.mubr.bf16.mxu0 0
  %808 = vmatmul.mubr.bf16.gmra.mxu0 %v773
  %v809 = vpop.f32.mrf.mxu0
  %v810 = vadd.f32 0.0, %v809
  %v811 = vpop.f32.mrf.mxu0
  %v812 = vadd.f32 0.0, %v811
  %v813 = vpop.f32.mrf.mxu0
  %v814 = vpop.f32.mrf.mxu0
  %815 = vdwg.mxu0
  %v818 = vcombine.low %v810, %v812
  %v820 = vunpack.c.l.s4 1983009808
  %v821 = vunpack.c.0.s8 %v820
  %v822 = vlaneseq
  %v823 = vshrl.u32 %v822, 7
  %v824 = vsub.s32 %v821, %v823
  %v825 = vrot.slane %v818, %v824
  %827 = vst [vmem:[%s3] sm:$0xf] %v825
  // Predicated region
  $region14: #{linear_modulator_forward.1} parent=0 // pred_check
    _
  $region15: #{linear_modulator_forward.1} parent=0 // pred_check_branch
    %829 = sbr.rel (0) target = $region17
  $region16: #{linear_modulator_forward.1} parent=0 // pred_region
    _
  $region17: #{linear_modulator_forward.1} parent=0 // pred_fallthru
    _
  // Predicated region
  $region18: #{linear_modulator_forward.1} parent=0 // pred_check
    _
  $region19: #{linear_modulator_forward.1} parent=0 // pred_check_branch
    %831 = sbr.rel (0) target = $region21
  $region20: #{linear_modulator_forward.1} parent=0 // pred_region
    _
  $region21: #{linear_modulator_forward.1} parent=0 // pred_fallthru
    _

</llo_original>
